<compile_context>
chip_gen: v5e
topology: v5e:2x2
jax: 0.10.0
libtpu: 0.0.40
codegen_flags: <defaults>
</compile_context>

<pallas_src>
import jax
import jax.numpy as jnp
import numpy as np
from jax.experimental import pallas as pl
from jax.experimental.pallas import tpu as pltpu


def _round_up(x, m):
    return ((x + m - 1) // m) * m


# ---------------------------------------------------------------------------
# One-time parameter layout transform (hoisted out of any per-step path).
# ---------------------------------------------------------------------------
def prepare_params(params, input_dim, hidden_dim, matmul_dtype=jnp.bfloat16):
    """Transpose PyTorch-layout weights, split input/hidden parts, fuse the
    three gates along the output axis, lane-pad hidden dim to a multiple of
    128, and cast matmul operands to bf16 (f32 accumulation in-kernel).

    PyTorch layout: W_* shape (H, D_in + H), b_* shape (H,); Linear is x@W.T+b.
    """
    d_in, h = input_dim, hidden_dim
    hp = _round_up(max(h, 128), 128)

    def split(w):
        wt = jnp.transpose(jnp.asarray(w, jnp.float32))  # (d_in + h, h)
        return wt[:d_in], wt[d_in:]

    wr_x, wr_h = split(params["W_r"])
    wu_x, wu_h = split(params["W_u"])
    wc_x, wc_h = split(params["W_c"])

    def pad_x(w):                                        # (d_in, h) -> (d_in, hp)
        return jnp.pad(w, ((0, 0), (0, hp - h)))

    def pad_h(w):                                        # (h, h) -> (hp, hp)
        return jnp.pad(w, ((0, hp - h), (0, hp - h)))

    def pad_b(v):
        return jnp.pad(jnp.asarray(v, jnp.float32), (0, hp - h))

    wx = jnp.concatenate([pad_x(wr_x), pad_x(wu_x), pad_x(wc_x)],
                         axis=1).astype(matmul_dtype)    # (d_in, 3*hp)
    wh_ru = jnp.concatenate([pad_h(wr_h), pad_h(wu_h)],
                            axis=1).astype(matmul_dtype)  # (hp, 2*hp)
    wh_c = pad_h(wc_h).astype(matmul_dtype)               # (hp, hp)
    b = jnp.concatenate([pad_b(params["b_r"]), pad_b(params["b_u"]),
                         pad_b(params["b_c"])]).reshape(1, 3 * hp)  # f32

    return {"wx": wx, "wh_ru": wh_ru, "wh_c": wh_c, "b": b,
            "input_dim": d_in, "hidden_dim": h, "hidden_pad": hp}


# ---------------------------------------------------------------------------
# Kernel 1: single AUGRU step (the module's forward, fully inside Pallas).
# ---------------------------------------------------------------------------
def _augru_cell_kernel(x_ref, h_ref, att_ref, wx_ref, wh_ru_ref, wh_c_ref,
                       b_ref, out_ref):
    hp = h_ref.shape[-1]
    x = x_ref[...]
    h = h_ref[...]                       # f32 for the gating math
    att = att_ref[...]                   # (TB, 1)

    # Fused gate projections (bf16 MXU operands, f32 accumulation).
    gx = jnp.dot(x.astype(jnp.bfloat16), wx_ref[...],
                 preferred_element_type=jnp.float32) + b_ref[...]   # (TB, 3*Hp)
    gh = jnp.dot(h.astype(jnp.bfloat16), wh_ru_ref[...],
                 preferred_element_type=jnp.float32)                # (TB, 2*Hp)

    r = jax.nn.sigmoid(gx[:, :hp] + gh[:, :hp])
    u = jax.nn.sigmoid(gx[:, hp:2 * hp] + gh[:, hp:])

    c = jnp.tanh(gx[:, 2 * hp:]
                 + jnp.dot((r * h).astype(jnp.bfloat16), wh_c_ref[...],
                           preferred_element_type=jnp.float32))

    # (1 - att*u)*h + att*u*c  ==  h + (att*u)*(c - h)  (single att broadcast)
    out_ref[...] = (h + (att * u) * (c - h)).astype(out_ref.dtype)


def augru_cell(x_t, h_prev, att_score_t, prep):
    """Single AUGRU step: x_t (B, D_in), h_prev (B, H), att_score_t (B,)."""
    b, d_in = x_t.shape
    h = prep["hidden_dim"]
    hp = prep["hidden_pad"]
    assert d_in == prep["input_dim"] and h_prev.shape[-1] == h

    tb = min(512, _round_up(b, 16))
    b_pad = _round_up(b, tb)

    x_p = jnp.pad(x_t.astype(jnp.float32), ((0, b_pad - b), (0, 0)))
    h_p = jnp.pad(h_prev.astype(jnp.float32), ((0, b_pad - b), (0, hp - h)))
    att_p = jnp.pad(att_score_t.astype(jnp.float32).reshape(b, 1),
                    ((0, b_pad - b), (0, 0)))

    w_bytes = (d_in * 3 * hp + hp * 2 * hp + hp * hp) * 2 + 3 * hp * 4
    tile_bytes = (tb * d_in + tb * hp * 2 + tb * 1) * 4
    vlim = int(min(64 << 20, max(32 << 20, 2 * (w_bytes + tile_bytes) + (8 << 20))))

    cost = pl.CostEstimate(
        flops=int(2 * b_pad * (d_in * 3 * hp + 3 * hp * hp)),
        transcendentals=int(3 * b_pad * hp),
        bytes_accessed=int((x_p.size + h_p.size + att_p.size) * 4
                           + w_bytes + b_pad * hp * 4),
    )

    out = pl.pallas_call(
        _augru_cell_kernel,
        out_shape=jax.ShapeDtypeStruct((b_pad, hp), jnp.float32),
        grid_spec=pltpu.PrefetchScalarGridSpec(
            num_scalar_prefetch=0,
            grid=(b_pad // tb,),
            in_specs=[
                pl.BlockSpec((tb, d_in), lambda i: (i, 0)),        # x
                pl.BlockSpec((tb, hp), lambda i: (i, 0)),          # h_prev
                pl.BlockSpec((tb, 1), lambda i: (i, 0)),           # att
                pl.BlockSpec((d_in, 3 * hp), lambda i: (0, 0)),    # wx (resident)
                pl.BlockSpec((hp, 2 * hp), lambda i: (0, 0)),      # wh_ru
                pl.BlockSpec((hp, hp), lambda i: (0, 0)),          # wh_c
                pl.BlockSpec((1, 3 * hp), lambda i: (0, 0)),       # fused bias
            ],
            out_specs=pl.BlockSpec((tb, hp), lambda i: (i, 0)),
        ),
        compiler_params=pltpu.CompilerParams(
            dimension_semantics=("parallel",),
            vmem_limit_bytes=vlim,
        ),
        cost_estimate=cost,
    )(x_p, h_p, att_p, prep["wx"], prep["wh_ru"], prep["wh_c"], prep["b"])

    return out[:b, :h].astype(h_prev.dtype)


# ---------------------------------------------------------------------------
# Kernel 2: full sequence fused into one pallas_call (the high-value change).
#   grid = (batch_tiles, T);  batch axis "parallel", time axis "arbitrary".
#   h lives in VMEM scratch across the whole T sweep; hidden-side weights are
#   VMEM-resident; the x-side projection gx (bias folded, f32) is streamed
#   one (TB, 3*Hp) tile per step.
# ---------------------------------------------------------------------------
def _augru_seq_kernel(gx_ref, att_ref, h0_ref, wh_ru_ref, wh_c_ref,
                      hseq_ref, h_scr):
    hp = h_scr.shape[-1]
    t = pl.program_id(1)

    @pl.when(t == 0)
    def _():
        h_scr[...] = h0_ref[...]          # load carried state once per tile

    h = h_scr[...]                        # f32 recurrent state (VMEM only)
    gx = gx_ref[0]                        # (TB, 3*Hp), bias already folded
    att = att_ref[0]                      # (TB, 1)

    gh = jnp.dot(h.astype(jnp.bfloat16), wh_ru_ref[...],
                 preferred_element_type=jnp.float32)            # (TB, 2*Hp)

    r = jax.nn.sigmoid(gx[:, :hp] + gh[:, :hp])
    u = jax.nn.sigmoid(gx[:, hp:2 * hp] + gh[:, hp:])

    c = jnp.tanh(gx[:, 2 * hp:]
                 + jnp.dot((r * h).astype(jnp.bfloat16), wh_c_ref[...],
                           preferred_element_type=jnp.float32))

    h_new = h + (att * u) * (c - h)       # == (1-att*u)*h + att*u*c
    h_scr[...] = h_new
    hseq_ref[0] = h_new.astype(hseq_ref.dtype)


def augru_sequence(x_seq, h0, att_seq, prep):
    """Applies the AUGRU cell over a sequence inside ONE kernel.

    x_seq (T, B, D_in), h0 (B, H), att_seq (T, B) -> (T, B, H) hidden states.
    """
    t_len, b, d_in = x_seq.shape
    h = prep["hidden_dim"]
    hp = prep["hidden_pad"]
    assert d_in == prep["input_dim"] and h0.shape[-1] == h

    tb = min(512, _round_up(b, 16))
    b_pad = _round_up(b, tb)

    # Pad ONCE for the whole sequence (no per-step pad/slice copies).
    x_p = jnp.pad(x_seq.astype(jnp.float32), ((0, 0), (0, b_pad - b), (0, 0)))
    h0_p = jnp.pad(h0.astype(jnp.float32), ((0, b_pad - b), (0, hp - h)))
    att_p = jnp.pad(att_seq.astype(jnp.float32)[..., None],
                    ((0, 0), (0, b_pad - b), (0, 0)))             # (T, B_pad, 1)

    # Input-side projection for ALL timesteps in one wide matmul, off the
    # recurrent path (tiny-K matmul removed from the per-step kernel); the
    # bias is folded here in f32, so no bias ref in the recurrent kernel.
    gx = (jnp.dot(x_p.reshape(t_len * b_pad, d_in).astype(jnp.bfloat16),
                  prep["wx"], preferred_element_type=jnp.float32)
          + prep["b"]).reshape(t_len, b_pad, 3 * hp)              # f32

    # VMEM budget: resident weights (double-buffered by default) + streamed
    # tiles (x2 buffers) + the f32 h scratch, with headroom.
    w_bytes = (hp * 2 * hp + hp * hp) * 2
    tile_bytes = (tb * 3 * hp + tb + tb * hp + tb * hp) * 4
    vlim = int(min(64 << 20,
                   max(32 << 20, 2 * (w_bytes + tile_bytes) + tb * hp * 4 + (8 << 20))))

    cost = pl.CostEstimate(
        flops=int(2 * t_len * b_pad * 3 * hp * hp),
        transcendentals=int(3 * t_len * b_pad * hp),
        bytes_accessed=int((gx.size + att_p.size + h0_p.size) * 4
                           + w_bytes + t_len * b_pad * hp * 4),
    )

    out = pl.pallas_call(
        _augru_seq_kernel,
        out_shape=jax.ShapeDtypeStruct((t_len, b_pad, hp), jnp.float32),
        grid_spec=pltpu.PrefetchScalarGridSpec(
            num_scalar_prefetch=0,
            grid=(b_pad // tb, t_len),
            in_specs=[
                pl.BlockSpec((1, tb, 3 * hp), lambda i, t: (t, i, 0)),  # gx tile
                pl.BlockSpec((1, tb, 1), lambda i, t: (t, i, 0)),       # att tile
                pl.BlockSpec((tb, hp), lambda i, t: (i, 0)),            # h0 tile
                pl.BlockSpec((hp, 2 * hp), lambda i, t: (0, 0)),        # wh_ru (resident)
                pl.BlockSpec((hp, hp), lambda i, t: (0, 0)),            # wh_c  (resident)
            ],
            out_specs=pl.BlockSpec((1, tb, hp), lambda i, t: (t, i, 0)),
            scratch_shapes=[pltpu.VMEM((tb, hp), jnp.float32)],          # carried h
        ),
        compiler_params=pltpu.CompilerParams(
            dimension_semantics=("parallel", "arbitrary"),
            vmem_limit_bytes=vlim,
        ),
        cost_estimate=cost,
    )(gx, att_p, h0_p, prep["wh_ru"], prep["wh_c"])

    return out[:, :b, :h].astype(h0.dtype)


# ---------------------------------------------------------------------------
# Pure-JAX f32 references mirroring the PyTorch forward exactly.
# ---------------------------------------------------------------------------
def _ref_augru_cell(x_t, h_prev, att_score_t, params):
    combined = jnp.concatenate([x_t, h_prev], axis=-1)
    r = jax.nn.sigmoid(combined @ params["W_r"].T + params["b_r"])
    u = jax.nn.sigmoid(combined @ params["W_u"].T + params["b_u"])
    combined_reset = jnp.concatenate([x_t, r * h_prev], axis=-1)
    c = jnp.tanh(combined_reset @ params["W_c"].T + params["b_c"])
    u_ = att_score_t[..., None] * u
    return (1.0 - u_) * h_prev + u_ * c


def _ref_augru_sequence(x_seq, h0, att_seq, params):
    h = h0
    outs = []
    for t in range(x_seq.shape[0]):
        h = _ref_augru_cell(x_seq[t], h, att_seq[t], params)
        outs.append(h)
    return jnp.stack(outs, axis=0)


def init_params(key, input_dim, hidden_dim):
    """Deterministic init mimicking nn.Linear default (uniform +/- 1/sqrt(fan_in))."""
    fan_in = input_dim + hidden_dim
    bound = 1.0 / np.sqrt(fan_in)
    keys = jax.random.split(key, 6)
    names = ["W_r", "b_r", "W_u", "b_u", "W_c", "b_c"]
    shapes = [
        (hidden_dim, fan_in), (hidden_dim,),
        (hidden_dim, fan_in), (hidden_dim,),
        (hidden_dim, fan_in), (hidden_dim,),
    ]
    return {name: jax.random.uniform(k, shape, jnp.float32, -bound, bound)
            for k, name, shape in zip(keys, names, shapes)}


if __name__ == "__main__":
    B, T, INPUT_DIM, HIDDEN_DIM = 8, 6, 16, 32

    key = jax.random.PRNGKey(0)
    k_x, k_h, k_a, k_p = jax.random.split(key, 4)

    x_seq = jax.random.normal(k_x, (T, B, INPUT_DIM), jnp.float32)
    h0 = jax.random.normal(k_h, (B, HIDDEN_DIM), jnp.float32)
    att_seq = jax.random.uniform(k_a, (T, B), jnp.float32)
    params = init_params(k_p, INPUT_DIM, HIDDEN_DIM)

    # One-time weight layout prep (hoisted out of the per-step path).
    prep = prepare_params(params, INPUT_DIM, HIDDEN_DIM)

    # 1) Single-step cell (the exact nn.Module forward).
    h1 = jax.block_until_ready(augru_cell(x_seq[0], h0, att_seq[0], prep))
    h1_ref = _ref_augru_cell(x_seq[0], h0, att_seq[0], params)
    np.testing.assert_allclose(np.asarray(h1), np.asarray(h1_ref),
                               rtol=2e-2, atol=2e-2)

    # 2) Sequence-fused kernel (time loop inside the kernel, h in VMEM).
    h_seq = jax.block_until_ready(augru_sequence(x_seq, h0, att_seq, prep))
    h_seq_ref = _ref_augru_sequence(x_seq, h0, att_seq, params)
    np.testing.assert_allclose(np.asarray(h_seq), np.asarray(h_seq_ref),
                               rtol=2e-2, atol=2e-2)

    print("KERNEL_OK")
</pallas_src>

<mosaic_0001>
module attributes {stable_mosaic.version = 11 : i64} {
  func.func @_augru_cell_kernel(%arg0: i32, %arg1: memref<16x16xf32, #tpu.memory_space<vmem>>, %arg2: memref<16x128xf32, #tpu.memory_space<vmem>>, %arg3: memref<16x1xf32, #tpu.memory_space<vmem>>, %arg4: memref<16x384xbf16, #tpu.memory_space<vmem>>, %arg5: memref<128x256xbf16, #tpu.memory_space<vmem>>, %arg6: memref<128x128xbf16, #tpu.memory_space<vmem>>, %arg7: memref<1x384xf32, #tpu.memory_space<vmem>>, %arg8: memref<16x128xf32, #tpu.memory_space<vmem>>) attributes {dimension_semantics = [#tpu.dimension_semantics<parallel>], iteration_bounds = array<i64: 1>, scalar_prefetch = 0 : i64, scratch_operands = 0 : i64, tpu.core_type = #tpu.core_type<tc>, window_params = [{transform_indices = @transform_0, window_bounds = array<i64: 16, 16>}, {transform_indices = @transform_1, window_bounds = array<i64: 16, 128>}, {transform_indices = @transform_2, window_bounds = array<i64: 16, 1>}, {pipeline_mode = #tpu.pipeline_mode<synchronous>, transform_indices = @transform_3, window_bounds = array<i64: 16, 384>}, {pipeline_mode = #tpu.pipeline_mode<synchronous>, transform_indices = @transform_4, window_bounds = array<i64: 128, 256>}, {pipeline_mode = #tpu.pipeline_mode<synchronous>, transform_indices = @transform_5, window_bounds = array<i64: 128, 128>}, {pipeline_mode = #tpu.pipeline_mode<synchronous>, transform_indices = @transform_6, window_bounds = array<i64: 1, 384>}, {transform_indices = @transform_7, window_bounds = array<i64: 16, 128>}]} {
    %c0 = arith.constant 0 : index
    %c0_0 = arith.constant 0 : index
    %0 = vector.load %arg1[%c0, %c0_0] : memref<16x16xf32, #tpu.memory_space<vmem>>, vector<16x16xf32>
    %c0_1 = arith.constant 0 : index
    %c0_2 = arith.constant 0 : index
    %1 = vector.load %arg2[%c0_1, %c0_2] : memref<16x128xf32, #tpu.memory_space<vmem>>, vector<16x128xf32>
    %c0_3 = arith.constant 0 : index
    %c0_4 = arith.constant 0 : index
    %2 = vector.load %arg3[%c0_3, %c0_4] : memref<16x1xf32, #tpu.memory_space<vmem>>, vector<16x1xf32>
    %3 = arith.truncf %0 : vector<16x16xf32> to vector<16x16xbf16>
    %c0_5 = arith.constant 0 : index
    %c0_6 = arith.constant 0 : index
    %4 = vector.load %arg4[%c0_5, %c0_6] : memref<16x384xbf16, #tpu.memory_space<vmem>>, vector<16x384xbf16>
    %cst = arith.constant dense<0.000000e+00> : vector<16x384xf32>
    %5 = tpu.matmul %3, %4, %cst {dimension_numbers = #tpu.dot_dimension_numbers<[1], [0], [0], [1], [0, 0, 1, 1], [], []>} : vector<16x16xbf16>, vector<16x384xbf16>, vector<16x384xf32> -> vector<16x384xf32>
    %c0_7 = arith.constant 0 : index
    %c0_8 = arith.constant 0 : index
    %6 = vector.load %arg7[%c0_7, %c0_8] : memref<1x384xf32, #tpu.memory_space<vmem>>, vector<1x384xf32>
    %7 = vector.broadcast %6 : vector<1x384xf32> to vector<16x384xf32>
    %8 = arith.addf %5, %7 : vector<16x384xf32>
    %9 = arith.truncf %1 : vector<16x128xf32> to vector<16x128xbf16>
    %c0_9 = arith.constant 0 : index
    %c0_10 = arith.constant 0 : index
    %10 = vector.load %arg5[%c0_9, %c0_10] : memref<128x256xbf16, #tpu.memory_space<vmem>>, vector<128x256xbf16>
    %cst_11 = arith.constant dense<0.000000e+00> : vector<16x256xf32>
    %11 = tpu.matmul %9, %10, %cst_11 {dimension_numbers = #tpu.dot_dimension_numbers<[1], [0], [0], [1], [0, 0, 1, 1], [], []>} : vector<16x128xbf16>, vector<128x256xbf16>, vector<16x256xf32> -> vector<16x256xf32>
    %12 = vector.extract_strided_slice %8 {offsets = [0, 0], sizes = [16, 128], strides = [1, 1]} : vector<16x384xf32> to vector<16x128xf32>
    %13 = vector.extract_strided_slice %11 {offsets = [0, 0], sizes = [16, 128], strides = [1, 1]} : vector<16x256xf32> to vector<16x128xf32>
    %14 = arith.addf %12, %13 : vector<16x128xf32>
    %15 = arith.negf %14 : vector<16x128xf32>
    %16 = math.exp %15 : vector<16x128xf32>
    %cst_12 = arith.constant 1.000000e+00 : f32
    %17 = vector.broadcast %cst_12 : f32 to vector<16x128xf32>
    %18 = arith.addf %17, %16 : vector<16x128xf32>
    %19 = arith.divf %17, %18 : vector<16x128xf32>
    %20 = vector.extract_strided_slice %8 {offsets = [0, 128], sizes = [16, 128], strides = [1, 1]} : vector<16x384xf32> to vector<16x128xf32>
    %21 = vector.extract_strided_slice %11 {offsets = [0, 128], sizes = [16, 128], strides = [1, 1]} : vector<16x256xf32> to vector<16x128xf32>
    %22 = arith.addf %20, %21 : vector<16x128xf32>
    %23 = arith.negf %22 : vector<16x128xf32>
    %24 = math.exp %23 : vector<16x128xf32>
    %cst_13 = arith.constant 1.000000e+00 : f32
    %25 = vector.broadcast %cst_13 : f32 to vector<16x128xf32>
    %26 = arith.addf %25, %24 : vector<16x128xf32>
    %27 = arith.divf %25, %26 : vector<16x128xf32>
    %28 = vector.extract_strided_slice %8 {offsets = [0, 256], sizes = [16, 128], strides = [1, 1]} : vector<16x384xf32> to vector<16x128xf32>
    %29 = arith.mulf %19, %1 : vector<16x128xf32>
    %30 = arith.truncf %29 : vector<16x128xf32> to vector<16x128xbf16>
    %c0_14 = arith.constant 0 : index
    %c0_15 = arith.constant 0 : index
    %31 = vector.load %arg6[%c0_14, %c0_15] : memref<128x128xbf16, #tpu.memory_space<vmem>>, vector<128x128xbf16>
    %cst_16 = arith.constant dense<0.000000e+00> : vector<16x128xf32>
    %32 = tpu.matmul %30, %31, %cst_16 {dimension_numbers = #tpu.dot_dimension_numbers<[1], [0], [0], [1], [0, 0, 1, 1], [], []>} : vector<16x128xbf16>, vector<128x128xbf16>, vector<16x128xf32> -> vector<16x128xf32>
    %33 = arith.addf %28, %32 : vector<16x128xf32>
    %34 = math.tanh %33 : vector<16x128xf32>
    %35 = vector.broadcast %2 : vector<16x1xf32> to vector<16x128xf32>
    %36 = arith.mulf %35, %27 : vector<16x128xf32>
    %37 = arith.subf %34, %1 : vector<16x128xf32>
    %38 = arith.mulf %36, %37 : vector<16x128xf32>
    %39 = arith.addf %1, %38 : vector<16x128xf32>
    %c0_17 = arith.constant 0 : index
    %c0_18 = arith.constant 0 : index
    %40 = vector.load %arg8[%c0_17, %c0_18] : memref<16x128xf32, #tpu.memory_space<vmem>>, vector<16x128xf32>
    tpu.vector_store %arg8[%c0_17, %c0_18], %39 {strides = array<i32>} : memref<16x128xf32, #tpu.memory_space<vmem>>, vector<16x128xf32>,
    return
  }
  func.func @transform_0(%arg0: i32) -> (i32, i32) {
    %c0_i32 = arith.constant 0 : i32
    %c0_i32_0 = arith.constant 0 : i32
    return %arg0, %c0_i32 : i32, i32
  }
  func.func @transform_1(%arg0: i32) -> (i32, i32) {
    %c0_i32 = arith.constant 0 : i32
    %c0_i32_0 = arith.constant 0 : i32
    return %arg0, %c0_i32 : i32, i32
  }
  func.func @transform_2(%arg0: i32) -> (i32, i32) {
    %c0_i32 = arith.constant 0 : i32
    %c0_i32_0 = arith.constant 0 : i32
    return %arg0, %c0_i32 : i32, i32
  }
  func.func @transform_3(%arg0: i32) -> (i32, i32) {
    %c0_i32 = arith.constant 0 : i32
    %c0_i32_0 = arith.constant 0 : i32
    %c0_i32_1 = arith.constant 0 : i32
    return %c0_i32, %c0_i32_0 : i32, i32
  }
  func.func @transform_4(%arg0: i32) -> (i32, i32) {
    %c0_i32 = arith.constant 0 : i32
    %c0_i32_0 = arith.constant 0 : i32
    %c0_i32_1 = arith.constant 0 : i32
    return %c0_i32, %c0_i32_0 : i32, i32
  }
  func.func @transform_5(%arg0: i32) -> (i32, i32) {
    %c0_i32 = arith.constant 0 : i32
    %c0_i32_0 = arith.constant 0 : i32
    %c0_i32_1 = arith.constant 0 : i32
    return %c0_i32, %c0_i32_0 : i32, i32
  }
  func.func @transform_6(%arg0: i32) -> (i32, i32) {
    %c0_i32 = arith.constant 0 : i32
    %c0_i32_0 = arith.constant 0 : i32
    %c0_i32_1 = arith.constant 0 : i32
    return %c0_i32, %c0_i32_0 : i32, i32
  }
  func.func @transform_7(%arg0: i32) -> (i32, i32) {
    %c0_i32 = arith.constant 0 : i32
    %c0_i32_0 = arith.constant 0 : i32
    return %arg0, %c0_i32 : i32, i32
  }
}

</mosaic_0001>

<llo_original>
// kernel: tpu_custom_call.1
$region0: #{tpu_custom_call.1}
  #allocation0 [shape = 'u32[]', space=smem, size = 0x4, offset = 0x4, fixed_abs, tag = 'smem constant byte address 0x4 - core index']
  #allocation1 [shape = 'u32[72,128]{1,0:T(1,128)}', space=vmem, size = 0x9000, scoped, tag = 'internal scratch']
  %s0 = inlined_call_operand.vmem [shape: f32[16,16], index: 0, kind: input, shape index: {}]
  %s1 = inlined_call_operand.hbm [shape: f32[16,128], index: 1, kind: input, shape index: {}]
  %s2 = inlined_call_operand.vmem [shape: f32[16,1], index: 2, kind: input, shape index: {}]
  %s3 = inlined_call_operand.hbm [shape: bf16[16,384], index: 3, kind: input, shape index: {}]
  %s4 = inlined_call_operand.hbm [shape: bf16[128,256], index: 4, kind: input, shape index: {}]
  %s5 = inlined_call_operand.hbm [shape: bf16[128,128], index: 5, kind: input, shape index: {}]
  %s6 = inlined_call_operand.vmem [shape: f32[1,384], index: 6, kind: input, shape index: {}]
  %s7 = inlined_call_operand.hbm [shape: f32[16,128], index: 7, kind: output, shape index: {}]
  %s8 = sld [smem:[#allocation0]]
  $region54: #{tpu_custom_call.1} parent=0
    _
  %s10 = ssub.s32 1, %s8
  %s11 = scalar_select 0, %s10, %s8
  $region1: #{tpu_custom_call.1} parent=0
    #allocation2 [shape = 'u8[8192]{0}', space=vmem, size = 0x2000, scoped, tag = 'input window, operand 1, single buffered']
    #allocation3 [shape = 's32[1]{0}', space=sflag, size = 0x4, scoped, tag = 'scoped memory for tpu_custom_call.1']
    #allocation4 [shape = 's32[1]{0}', space=sflag, size = 0x4, scoped, tag = 'scoped memory for tpu_custom_call.1']
    #allocation5 [shape = 'u8[12288]{0}', space=vmem, size = 0x3000, scoped, tag = 'input window, operand 3, single buffered']
    #allocation6 [shape = 's32[1]{0}', space=sflag, size = 0x4, scoped, tag = 'scoped memory for tpu_custom_call.1']
    #allocation7 [shape = 'u8[65536]{0}', space=vmem, size = 0x10000, scoped, tag = 'input window, operand 4, single buffered']
    #allocation8 [shape = 'u8[32768]{0}', space=vmem, size = 0x8000, scoped, tag = 'input window, operand 5, single buffered']
    #allocation9 [shape = 's32[1]{0}', space=sflag, size = 0x4, scoped, tag = 'scoped memory for tpu_custom_call.1']
    #allocation10 [shape = 'u8[8192]{0}', space=vmem, size = 0x2000, scoped, tag = 'output window, operand 0, single buffered']
    %12 = vsyncpa [#allocation3], 0
    %13 = vsyncpa [#allocation6], 0
    %14 = vsyncpa [#allocation9], 0
    %15 = vsyncpa [#allocation4], 0
    // Predicated region
    $region2: #{tpu_custom_call.1} parent=1 // pred_check
      _
    $region3: #{tpu_custom_call.1} parent=1 // pred_check_branch
      %17 = sbr.rel (0) target = $region5
    $region4: #{tpu_custom_call.1} parent=1 // pred_region
      _
    $region5: #{tpu_custom_call.1} parent=1 // pred_fallthru
      _
    // Predicated region
    $region6: #{tpu_custom_call.1} parent=1 // pred_check
      _
    $region7: #{tpu_custom_call.1} parent=1 // pred_check_branch
      %19 = sbr.rel (0) target = $region9
    $region8: #{tpu_custom_call.1} parent=1 // pred_region
      %21 = vsyncadd [#allocation3], 0
      %s22 = sshll.u32 %s1, 4
      %s23 = int_to_ptr.hbm [resolvable:$true] %s22
      %s24 = sshll.u32 [#allocation2], 4
      %s25 = int_to_ptr.vmem [resolvable:$true] %s24
      %30 = dma.hbm_to_vmem [thread:$0]  %s23, 256, %s25, [#allocation3], 128, 128, 8
    $region9: #{tpu_custom_call.1} parent=1 // pred_fallthru
      _
    // Predicated region
    $region10: #{tpu_custom_call.1} parent=1 // pred_check
      _
    $region11: #{tpu_custom_call.1} parent=1 // pred_check_branch
      %32 = sbr.rel (0) target = $region13
    $region12: #{tpu_custom_call.1} parent=1 // pred_region
      _
    $region13: #{tpu_custom_call.1} parent=1 // pred_fallthru
      _
    // Predicated region
    $region14: #{tpu_custom_call.1} parent=1 // pred_check
      _
    $region15: #{tpu_custom_call.1} parent=1 // pred_check_branch
      %34 = sbr.rel (0) target = $region17
    $region16: #{tpu_custom_call.1} parent=1 // pred_region
      %36 = vsyncadd [#allocation6], 0
      %s37 = sshll.u32 %s3, 4
      %s38 = int_to_ptr.hbm [resolvable:$true] %s37
      %s39 = sshll.u32 [#allocation5], 4
      %s40 = int_to_ptr.vmem [resolvable:$true] %s39
      %45 = dma.hbm_to_vmem [thread:$0]  %s38, 384, %s40, [#allocation6], 192, 192, 12
    $region17: #{tpu_custom_call.1} parent=1 // pred_fallthru
      _
    // Predicated region
    $region18: #{tpu_custom_call.1} parent=1 // pred_check
      _
    $region19: #{tpu_custom_call.1} parent=1 // pred_check_branch
      %47 = sbr.rel (0) target = $region21
    $region20: #{tpu_custom_call.1} parent=1 // pred_region
      %49 = vsyncadd [#allocation6], 0
      %s50 = sshll.u32 %s4, 4
      %s51 = int_to_ptr.hbm [resolvable:$true] %s50
      %s52 = sshll.u32 [#allocation7], 4
      %s53 = int_to_ptr.vmem [resolvable:$true] %s52
      %58 = dma.hbm_to_vmem [thread:$0]  %s51, 2048, %s53, [#allocation6], 128, 128, 8
    $region21: #{tpu_custom_call.1} parent=1 // pred_fallthru
      _
    // Predicated region
    $region22: #{tpu_custom_call.1} parent=1 // pred_check
      _
    $region23: #{tpu_custom_call.1} parent=1 // pred_check_branch
      %60 = sbr.rel (0) target = $region25
    $region24: #{tpu_custom_call.1} parent=1 // pred_region
      %62 = vsyncadd [#allocation9], 0
      %s63 = sshll.u32 %s5, 4
      %s64 = int_to_ptr.hbm [resolvable:$true] %s63
      %s65 = sshll.u32 [#allocation8], 4
      %s66 = int_to_ptr.vmem [resolvable:$true] %s65
      %71 = dma.hbm_to_vmem [thread:$0]  %s64, 1024, %s66, [#allocation9], 64, 64, 4
    $region25: #{tpu_custom_call.1} parent=1 // pred_fallthru
      _
    // Predicated region
    $region26: #{tpu_custom_call.1} parent=1 // pred_check
      _
    $region27: #{tpu_custom_call.1} parent=1 // pred_check_branch
      %73 = sbr.rel (0) target = $region29
    $region28: #{tpu_custom_call.1} parent=1 // pred_region
      _
    $region29: #{tpu_custom_call.1} parent=1 // pred_fallthru
      _
    // Predicated region
    $region30: #{tpu_custom_call.1} parent=1 // pred_check
      _
    $region31: #{tpu_custom_call.1} parent=1 // pred_check_branch
      %75 = sbr.rel (0) target = $region33
    $region32: #{tpu_custom_call.1} parent=1 // pred_region
      %77 = dma.done [#allocation3], 256
    $region33: #{tpu_custom_call.1} parent=1 // pred_fallthru
      _
    // Predicated region
    $region34: #{tpu_custom_call.1} parent=1 // pred_check
      _
    $region35: #{tpu_custom_call.1} parent=1 // pred_check_branch
      %79 = sbr.rel (0) target = $region37
    $region36: #{tpu_custom_call.1} parent=1 // pred_region
      %81 = dma.done [#allocation6], 384
    $region37: #{tpu_custom_call.1} parent=1 // pred_fallthru
      _
    // Predicated region
    $region38: #{tpu_custom_call.1} parent=1 // pred_check
      _
    $region39: #{tpu_custom_call.1} parent=1 // pred_check_branch
      %83 = sbr.rel (0) target = $region41
    $region40: #{tpu_custom_call.1} parent=1 // pred_region
      %85 = dma.done [#allocation6], 2048
    $region41: #{tpu_custom_call.1} parent=1 // pred_fallthru
      _
    // Predicated region
    $region42: #{tpu_custom_call.1} parent=1 // pred_check
      _
    $region43: #{tpu_custom_call.1} parent=1 // pred_check_branch
      %87 = sbr.rel (0) target = $region45
    $region44: #{tpu_custom_call.1} parent=1 // pred_region
      %89 = dma.done [#allocation9], 1024
    $region45: #{tpu_custom_call.1} parent=1 // pred_fallthru
      _
    %v91 = vld [vmem:[%s0] sm:$0xff]
    %v92 = vld [vmem:[%s0 + $0x8] sm:$0xff]
    %v93 = vld [vmem:[#allocation2] sm:$0xff]
    %v94 = vld [vmem:[#allocation2 + $0x8] sm:$0xff]
    %v95 = vld [vmem:[%s2] sm:$0xff]
    %v96 = vld [vmem:[%s2 + $0x8] sm:$0xff]
    %v97 = vpack.c.bf16 %v92, %v91
    %v98 = vld [vmem:[#allocation5] sm:$0xff]
    %v99 = vld [vmem:[#allocation5 + $0x8] sm:$0xf]
    %v100 = vld [vmem:[#allocation5 + $0xc] sm:$0xff]
    %v101 = vld [vmem:[#allocation5 + $0x14] sm:$0xf]
    %v102 = vld [vmem:[%s6] sm:$0x7]
    %v104 = vperm.slane %v102, 0
    %v105 = vperm.slane %v102, 1
    %v106 = vperm.slane %v102, 2
    %v114 = vunpack.c.l.b16 %v98
    %v115 = vunpack.c.h.b16 %v98
    %v116 = vunpack.c.l.b16 %v99
    %v117 = vunpack.c.l.b16 %v100
    %v118 = vunpack.c.h.b16 %v100
    %v119 = vunpack.c.l.b16 %v101
    %v120 = vpack.c.b16 %v117, %v114
    %v121 = vpack.c.b16 %v118, %v115
    %v122 = vpack.c.b16 %v119, %v116
    %vm126 = vcmask 130048
    %v128 = vsel %vm126, %v97, 0
    %130 = vmatpush.bf16.msra.mxu0 0
    %131 = vmatpush.bf16.msra.mxu0 0
    %132 = vmatpush.bf16.msra.mxu0 0
    %133 = vmatpush.bf16.msra.mxu0 0
    %134 = vmatpush.bf16.msra.mxu0 0
    %135 = vmatpush.bf16.msra.mxu0 0
    %136 = vmatpush.bf16.msra.mxu0 0
    %137 = vmatpush.bf16.msra.mxu0 %v120
    %138 = vmatmul.bf16.gmra.mxu0 %v128
    %v139 = vpop.f32.mrf.mxu0
    %v140 = vadd.f32 %v104, %v139
    %v141 = vpop.f32.mrf.mxu0
    %v142 = vadd.f32 %v104, %v141
    %143 = vdwg.mxu0
    %144 = vmatpush.bf16.msra.mxu0 0
    %145 = vmatpush.bf16.msra.mxu0 0
    %146 = vmatpush.bf16.msra.mxu0 0
    %147 = vmatpush.bf16.msra.mxu0 0
    %148 = vmatpush.bf16.msra.mxu0 0
    %149 = vmatpush.bf16.msra.mxu0 0
    %150 = vmatpush.bf16.msra.mxu0 0
    %151 = vmatpush.bf16.msra.mxu0 %v121
    %152 = vmatmul.bf16.gmra.mxu0 %v128
    %v153 = vpop.f32.mrf.mxu0
    %v154 = vadd.f32 %v105, %v153
    %v155 = vpop.f32.mrf.mxu0
    %v156 = vadd.f32 %v105, %v155
    %157 = vdwg.mxu0
    %158 = vmatpush.bf16.msra.mxu0 0
    %159 = vmatpush.bf16.msra.mxu0 0
    %160 = vmatpush.bf16.msra.mxu0 0
    %161 = vmatpush.bf16.msra.mxu0 0
    %162 = vmatpush.bf16.msra.mxu0 0
    %163 = vmatpush.bf16.msra.mxu0 0
    %164 = vmatpush.bf16.msra.mxu0 0
    %165 = vmatpush.bf16.msra.mxu0 %v122
    %166 = vmatmul.bf16.gmra.mxu0 %v128
    %v167 = vpop.f32.mrf.mxu0
    %v168 = vadd.f32 %v106, %v167
    %v169 = vpop.f32.mrf.mxu0
    %v170 = vadd.f32 %v106, %v169
    %171 = vdwg.mxu0
    %v172 = vpack.c.bf16 %v94, %v93
    %v173 = vld [vmem:[#allocation7] sm:$0xff]
    %v174 = vld [vmem:[#allocation7 + $0x8] sm:$0xff]
    %v175 = vld [vmem:[#allocation7 + $0x10] sm:$0xff]
    %v176 = vld [vmem:[#allocation7 + $0x18] sm:$0xff]
    %v177 = vld [vmem:[#allocation7 + $0x20] sm:$0xff]
    %v178 = vld [vmem:[#allocation7 + $0x28] sm:$0xff]
    %v179 = vld [vmem:[#allocation7 + $0x30] sm:$0xff]
    %v180 = vld [vmem:[#allocation7 + $0x38] sm:$0xff]
    %v181 = vld [vmem:[#allocation7 + $0x40] sm:$0xff]
    %v182 = vld [vmem:[#allocation7 + $0x48] sm:$0xff]
    %v183 = vld [vmem:[#allocation7 + $0x50] sm:$0xff]
    %v184 = vld [vmem:[#allocation7 + $0x58] sm:$0xff]
    %v185 = vld [vmem:[#allocation7 + $0x60] sm:$0xff]
    %v186 = vld [vmem:[#allocation7 + $0x68] sm:$0xff]
    %v187 = vld [vmem:[#allocation7 + $0x70] sm:$0xff]
    %v188 = vld [vmem:[#allocation7 + $0x78] sm:$0xff]
    %v205 = vunpack.c.l.b16 %v173
    %v206 = vunpack.c.h.b16 %v173
    %v207 = vunpack.c.l.b16 %v174
    %v208 = vunpack.c.h.b16 %v174
    %v209 = vunpack.c.l.b16 %v175
    %v210 = vunpack.c.h.b16 %v175
    %v211 = vunpack.c.l.b16 %v176
    %v212 = vunpack.c.h.b16 %v176
    %v213 = vunpack.c.l.b16 %v177
    %v214 = vunpack.c.h.b16 %v177
    %v215 = vunpack.c.l.b16 %v178
    %v216 = vunpack.c.h.b16 %v178
    %v217 = vunpack.c.l.b16 %v179
    %v218 = vunpack.c.h.b16 %v179
    %v219 = vunpack.c.l.b16 %v180
    %v220 = vunpack.c.h.b16 %v180
    %v221 = vunpack.c.l.b16 %v181
    %v222 = vunpack.c.h.b16 %v181
    %v223 = vunpack.c.l.b16 %v182
    %v224 = vunpack.c.h.b16 %v182
    %v225 = vunpack.c.l.b16 %v183
    %v226 = vunpack.c.h.b16 %v183
    %v227 = vunpack.c.l.b16 %v184
    %v228 = vunpack.c.h.b16 %v184
    %v229 = vunpack.c.l.b16 %v185
    %v230 = vunpack.c.h.b16 %v185
    %v231 = vunpack.c.l.b16 %v186
    %v232 = vunpack.c.h.b16 %v186
    %v233 = vunpack.c.l.b16 %v187
    %v234 = vunpack.c.h.b16 %v187
    %v235 = vunpack.c.l.b16 %v188
    %v236 = vunpack.c.h.b16 %v188
    %v237 = vpack.c.b16 %v207, %v205
    %v238 = vpack.c.b16 %v208, %v206
    %v239 = vpack.c.b16 %v211, %v209
    %v240 = vpack.c.b16 %v212, %v210
    %v241 = vpack.c.b16 %v215, %v213
    %v242 = vpack.c.b16 %v216, %v214
    %v243 = vpack.c.b16 %v219, %v217
    %v244 = vpack.c.b16 %v220, %v218
    %v245 = vpack.c.b16 %v223, %v221
    %v246 = vpack.c.b16 %v224, %v222
    %v247 = vpack.c.b16 %v227, %v225
    %v248 = vpack.c.b16 %v228, %v226
    %v249 = vpack.c.b16 %v231, %v229
    %v250 = vpack.c.b16 %v232, %v230
    %v251 = vpack.c.b16 %v235, %v233
    %v252 = vpack.c.b16 %v236, %v234
    %269 = vmatpush.bf16.msra.mxu0 %v251
    %270 = vmatpush.bf16.msra.mxu0 %v249
    %271 = vmatpush.bf16.msra.mxu0 %v247
    %272 = vmatpush.bf16.msra.mxu0 %v245
    %273 = vmatpush.bf16.msra.mxu0 %v243
    %274 = vmatpush.bf16.msra.mxu0 %v241
    %275 = vmatpush.bf16.msra.mxu0 %v239
    %276 = vmatpush.bf16.msra.mxu0 %v237
    %277 = vmatmul.bf16.gmra.mxu0 %v172
    %v278 = vpop.f32.mrf.mxu0
    %v279 = vadd.f32 0.0, %v278
    %v280 = vpop.f32.mrf.mxu0
    %v281 = vadd.f32 0.0, %v280
    %282 = vdwg.mxu0
    %283 = vmatpush.bf16.msra.mxu0 %v252
    %284 = vmatpush.bf16.msra.mxu0 %v250
    %285 = vmatpush.bf16.msra.mxu0 %v248
    %286 = vmatpush.bf16.msra.mxu0 %v246
    %287 = vmatpush.bf16.msra.mxu0 %v244
    %288 = vmatpush.bf16.msra.mxu0 %v242
    %289 = vmatpush.bf16.msra.mxu0 %v240
    %290 = vmatpush.bf16.msra.mxu0 %v238
    %291 = vmatmul.bf16.gmra.mxu0 %v172
    %v292 = vpop.f32.mrf.mxu0
    %v293 = vadd.f32 0.0, %v292
    %v294 = vpop.f32.mrf.mxu0
    %v295 = vadd.f32 0.0, %v294
    %296 = vdwg.mxu0
    %v297 = vadd.f32 %v140, %v279
    %v298 = vadd.f32 %v142, %v281
    %v299 = vxor.u32 %v297, 2147483648
    %v300 = vxor.u32 %v298, 2147483648
    %v301 = vmul.f32 %v299, 1.442695
    %v302 = vpow.pop %v301
    %v303 = vmul.f32 %v300, 1.442695
    %v304 = vpow.pop %v303
    %v305 = vadd.f32 %v302, 1.0
    %v306 = vadd.f32 %v304, 1.0
    %v307 = vrcp.pop %v305
    %v308 = vmul.f32 %v305, %v307
    %v309 = vsub.f32 1.0, %v308
    %v310 = vmul.f32 %v307, %v309
    %v311 = vadd.f32 %v307, %v310
    %vm312 = vweird.f32 %v305
    %vm313 = vweird.f32 %v307
    %vm314 = vmor %vm312, %vm313
    %v315 = vsel %vm314, %v307, %v311
    %v316 = vand.u32 2147483647, %v305
    %vm317 = vcmp.eq.f32.partialorder %v316, 8.507059e+37
    %v318 = vand.u32 %v305, 2147483648
    %v319 = vor.u32 1.1754944e-38, %v318
    %v320 = vsel %vm317, %v319, %v315
    %v321 = vmul.f32 1.0, %v320
    %v322 = vrcp.pop %v306
    %v323 = vmul.f32 %v306, %v322
    %v324 = vsub.f32 1.0, %v323
    %v325 = vmul.f32 %v322, %v324
    %v326 = vadd.f32 %v322, %v325
    %vm327 = vweird.f32 %v306
    %vm328 = vweird.f32 %v322
    %vm329 = vmor %vm327, %vm328
    %v330 = vsel %vm329, %v322, %v326
    %v331 = vand.u32 2147483647, %v306
    %vm332 = vcmp.eq.f32.partialorder %v331, 8.507059e+37
    %v333 = vand.u32 %v306, 2147483648
    %v334 = vor.u32 1.1754944e-38, %v333
    %v335 = vsel %vm332, %v334, %v330
    %v336 = vmul.f32 1.0, %v335
    %v337 = vadd.f32 %v154, %v293
    %v338 = vadd.f32 %v156, %v295
    %v339 = vxor.u32 %v337, 2147483648
    %v340 = vxor.u32 %v338, 2147483648
    %v341 = vmul.f32 %v339, 1.442695
    %v342 = vpow.pop %v341
    %v343 = vmul.f32 %v340, 1.442695
    %v344 = vpow.pop %v343
    %v345 = vadd.f32 %v342, 1.0
    %v346 = vadd.f32 %v344, 1.0
    %v347 = vrcp.pop %v345
    %v348 = vmul.f32 %v345, %v347
    %v349 = vsub.f32 1.0, %v348
    %v350 = vmul.f32 %v347, %v349
    %v351 = vadd.f32 %v347, %v350
    %vm352 = vweird.f32 %v345
    %vm353 = vweird.f32 %v347
    %vm354 = vmor %vm352, %vm353
    %v355 = vsel %vm354, %v347, %v351
    %v356 = vand.u32 2147483647, %v345
    %vm357 = vcmp.eq.f32.partialorder %v356, 8.507059e+37
    %v358 = vand.u32 %v345, 2147483648
    %v359 = vor.u32 1.1754944e-38, %v358
    %v360 = vsel %vm357, %v359, %v355
    %v361 = vmul.f32 1.0, %v360
    %v362 = vrcp.pop %v346
    %v363 = vmul.f32 %v346, %v362
    %v364 = vsub.f32 1.0, %v363
    %v365 = vmul.f32 %v362, %v364
    %v366 = vadd.f32 %v362, %v365
    %vm367 = vweird.f32 %v346
    %vm368 = vweird.f32 %v362
    %vm369 = vmor %vm367, %vm368
    %v370 = vsel %vm369, %v362, %v366
    %v371 = vand.u32 2147483647, %v346
    %vm372 = vcmp.eq.f32.partialorder %v371, 8.507059e+37
    %v373 = vand.u32 %v346, 2147483648
    %v374 = vor.u32 1.1754944e-38, %v373
    %v375 = vsel %vm372, %v374, %v370
    %v376 = vmul.f32 1.0, %v375
    %v377 = vmul.f32 %v321, %v93
    %v378 = vmul.f32 %v336, %v94
    %v379 = vpack.c.bf16 %v378, %v377
    %v380 = vld [vmem:[#allocation8] sm:$0xf]
    %v381 = vld [vmem:[#allocation8 + $0x4] sm:$0xf]
    %v382 = vld [vmem:[#allocation8 + $0x8] sm:$0xf]
    %v383 = vld [vmem:[#allocation8 + $0xc] sm:$0xf]
    %v384 = vld [vmem:[#allocation8 + $0x10] sm:$0xf]
    %v385 = vld [vmem:[#allocation8 + $0x14] sm:$0xf]
    %v386 = vld [vmem:[#allocation8 + $0x18] sm:$0xf]
    %v387 = vld [vmem:[#allocation8 + $0x1c] sm:$0xf]
    %v388 = vld [vmem:[#allocation8 + $0x20] sm:$0xf]
    %v389 = vld [vmem:[#allocation8 + $0x24] sm:$0xf]
    %v390 = vld [vmem:[#allocation8 + $0x28] sm:$0xf]
    %v391 = vld [vmem:[#allocation8 + $0x2c] sm:$0xf]
    %v392 = vld [vmem:[#allocation8 + $0x30] sm:$0xf]
    %v393 = vld [vmem:[#allocation8 + $0x34] sm:$0xf]
    %v394 = vld [vmem:[#allocation8 + $0x38] sm:$0xf]
    %v395 = vld [vmem:[#allocation8 + $0x3c] sm:$0xf]
    %v412 = vunpack.c.l.b16 %v380
    %v413 = vunpack.c.l.b16 %v381
    %v414 = vunpack.c.l.b16 %v382
    %v415 = vunpack.c.l.b16 %v383
    %v416 = vunpack.c.l.b16 %v384
    %v417 = vunpack.c.l.b16 %v385
    %v418 = vunpack.c.l.b16 %v386
    %v419 = vunpack.c.l.b16 %v387
    %v420 = vunpack.c.l.b16 %v388
    %v421 = vunpack.c.l.b16 %v389
    %v422 = vunpack.c.l.b16 %v390
    %v423 = vunpack.c.l.b16 %v391
    %v424 = vunpack.c.l.b16 %v392
    %v425 = vunpack.c.l.b16 %v393
    %v426 = vunpack.c.l.b16 %v394
    %v427 = vunpack.c.l.b16 %v395
    %v428 = vpack.c.b16 %v413, %v412
    %v429 = vpack.c.b16 %v415, %v414
    %v430 = vpack.c.b16 %v417, %v416
    %v431 = vpack.c.b16 %v419, %v418
    %v432 = vpack.c.b16 %v421, %v420
    %v433 = vpack.c.b16 %v423, %v422
    %v434 = vpack.c.b16 %v425, %v424
    %v435 = vpack.c.b16 %v427, %v426
    %444 = vmatpush.bf16.msra.mxu0 %v435
    %445 = vmatpush.bf16.msra.mxu0 %v434
    %446 = vmatpush.bf16.msra.mxu0 %v433
    %447 = vmatpush.bf16.msra.mxu0 %v432
    %448 = vmatpush.bf16.msra.mxu0 %v431
    %449 = vmatpush.bf16.msra.mxu0 %v430
    %450 = vmatpush.bf16.msra.mxu0 %v429
    %451 = vmatpush.bf16.msra.mxu0 %v428
    %452 = vmatmul.bf16.gmra.mxu0 %v379
    %v453 = vpop.f32.mrf.mxu0
    %v454 = vadd.f32 0.0, %v453
    %v455 = vpop.f32.mrf.mxu0
    %v456 = vadd.f32 0.0, %v455
    %457 = vdwg.mxu0
    %v458 = vadd.f32 %v168, %v454
    %v459 = vadd.f32 %v170, %v456
    %v460 = vtanh.pop %v458
    %v461 = vtanh.pop %v459
    %463 = vset.pattern.permute.xlu0 0
    %464 = vperm.xlu0 %463, %v95
    %v465 = vpop.permute.xlu0 %464
    %468 = vset.pattern.permute.xlu0 0
    %469 = vperm.xlu0 %468, %v96
    %v470 = vpop.permute.xlu0 %469
    %v472 = vmul.f32 %v465, %v361
    %v473 = vmul.f32 %v470, %v376
    %v474 = vsub.f32 %v460, %v93
    %v475 = vsub.f32 %v461, %v94
    %v476 = vmul.f32 %v472, %v474
    %v477 = vmul.f32 %v473, %v475
    %v478 = vadd.f32 %v93, %v476
    %v479 = vadd.f32 %v94, %v477
    %480 = vst [vmem:[#allocation10] sm:$0xff] %v478
    %481 = vst [vmem:[#allocation10 + $0x8] sm:$0xff] %v479
    // Predicated region
    $region46: #{tpu_custom_call.1} parent=1 // pred_check
      _
    $region47: #{tpu_custom_call.1} parent=1 // pred_check_branch
      %483 = sbr.rel (0) target = $region49
    $region48: #{tpu_custom_call.1} parent=1 // pred_region
      %485 = vsyncadd [#allocation4], 0
      %s486 = sshll.u32 [#allocation10], 4
      %s487 = int_to_ptr.vmem [resolvable:$true] %s486
      %s488 = sshll.u32 %s7, 4
      %s489 = int_to_ptr.hbm [resolvable:$true] %s488
      %494 = dma.vmem_to_hbm [thread:$0]  %s487, 256, %s489, [#allocation4], 128, 128, 8
    $region49: #{tpu_custom_call.1} parent=1 // pred_fallthru
      _
    // Predicated region
    $region50: #{tpu_custom_call.1} parent=1 // pred_check
      _
    $region51: #{tpu_custom_call.1} parent=1 // pred_check_branch
      %496 = sbr.rel (0) target = $region53
    $region52: #{tpu_custom_call.1} parent=1 // pred_region
      %498 = dma.done [#allocation4], 256
    $region53: #{tpu_custom_call.1} parent=1 // pred_fallthru
      _
    %499 = vsyncpa [#allocation3], 1
    %500 = vsyncpa [#allocation6], 1
    %501 = vsyncpa [#allocation9], 1
    %502 = vsyncpa [#allocation4], 1

</llo_original>
